<compile_context>
chip_gen: v6e
topology: v6e:2x2x1
jax: 0.10.0
libtpu: 0.0.40
codegen_flags: <defaults>
</compile_context>

<pallas_src>
import functools

import jax
import jax.numpy as jnp
from jax.experimental import pallas as pl
from jax.experimental.pallas import tpu as pltpu


def _round_up(x, m):
    return ((x + m - 1) // m) * m


def _default_vmem_limit_bytes():
    # v5e/v6e: 128 MiB physical VMEM -> allow large tiles.  v7x (and unknown):
    # 64 MiB physical -> stay at 48 MiB with headroom.
    try:
        kind = jax.devices()[0].device_kind.lower()
    except Exception:  # pragma: no cover - defensive only
        kind = ""
    if "v5" in kind or "v6" in kind:
        return 100 * 1024 * 1024
    return 48 * 1024 * 1024


def afcm_kernel(x1_ref, x2_ref, x3_ref,
                w1a_ref, w1b_ref, w1c_ref, b1_ref,
                w2g_ref, b2g_ref, w2f_ref, b2f_ref,
                o_ref, h_ref, *, hid):
    """One (batch-tile, OUT-tile) grid step.

    h_ref: persistent VMEM scratch holding relu([x1|x2|x3] @ [W1g|W1f] + b1)
    for the current batch tile; recomputed only when the OUT-tile index is 0.
    """
    wdt = w1a_ref.dtype                     # MXU compute dtype (bf16 or f32)

    @pl.when(pl.program_id(1) == 0)
    def _():
        # Fused layer 1.  torch.cat(dim=1) is expressed as a sum of three
        # chunked matmuls (row slices of the fused W1): no concat op, no extra
        # HBM pass over the activations.  Activations are cast in-kernel.
        h = jnp.dot(x1_ref[...].astype(wdt), w1a_ref[...],
                    preferred_element_type=jnp.float32)
        h = h + jnp.dot(x2_ref[...].astype(wdt), w1b_ref[...],
                        preferred_element_type=jnp.float32)
        h = h + jnp.dot(x3_ref[...].astype(wdt), w1c_ref[...],
                        preferred_element_type=jnp.float32)
        h_ref[...] = jnp.maximum(h + b1_ref[...].astype(jnp.float32), 0.0)

    # `hid` is a 128 multiple -> lane-aligned slices of the scratch (free views).
    hg = h_ref[:, :hid].astype(w2g_ref.dtype)   # gate branch hidden
    hf = h_ref[:, hid:].astype(w2f_ref.dtype)   # feature branch hidden

    # ---- gate net layer 2 + sigmoid (current OUT tile) ----
    zg = jnp.dot(hg, w2g_ref[...], preferred_element_type=jnp.float32) \
        + b2g_ref[...].astype(jnp.float32)
    gates = jax.nn.sigmoid(zg)                  # exp on the EUP slot

    # ---- feature net layer 2 (current OUT tile) ----
    feats = jnp.dot(hf, w2f_ref[...], preferred_element_type=jnp.float32) \
        + b2f_ref[...].astype(jnp.float32)

    # ---- gated output ----
    o_ref[...] = (feats * gates).astype(o_ref.dtype)


def prepare_params(params, in_splits, *, compute_dtype=None):
    """One-time weight preparation (call at init, NOT on the forward path).

    * fuses [W1g | W1f] into one (IN, 2*HID) layer-1 matrix,
    * zero-pads HID and OUT up to multiples of 128 (lane-aligned hidden split,
      clean MXU tiles, lane-dense output blocks),
    * casts weights to the compute dtype (e.g. bf16) once,
    * splits the fused W1 into the row chunks matching x1/x2/x3.

    params: dict of (in,out)-layout weights / (1,out) biases:
      w1g,b1g,w2g,b2g (gate net) and w1f,b1f,w2f,b2f (feature net).
    """
    wdt = jnp.dtype(compute_dtype) if compute_dtype is not None else params["w1g"].dtype
    IN, HID = params["w1g"].shape
    OUT = params["w2g"].shape[1]
    IN1, IN2, IN3 = in_splits
    assert IN1 + IN2 + IN3 == IN, "in_splits must sum to in_features"
    HID_P = _round_up(HID, 128)
    OUT_P = _round_up(OUT, 128)

    def pad_to(a, rows, cols):
        return jnp.pad(a, ((0, rows - a.shape[0]), (0, cols - a.shape[1])))

    # Fused layer-1: [W1g | W1f] -> (IN, 2*HID_P), split into the row chunks
    # matching x1/x2/x3.  Zero-padded HID columns stay zero through relu and
    # multiply zero W2 rows, so padding is exact.
    w1 = jnp.concatenate([pad_to(params["w1g"], IN, HID_P),
                          pad_to(params["w1f"], IN, HID_P)], axis=1).astype(wdt)
    b1 = jnp.concatenate([pad_to(params["b1g"], 1, HID_P),
                          pad_to(params["b1f"], 1, HID_P)], axis=1).astype(jnp.float32)
    # TODO(synk): if an input chunk width (e.g. the 500-wide x2 at real shapes)
    # is not a 128 multiple, also zero-pad that W1 row block here and have the
    # upstream layer emit the matching zero-padded activation chunk.
    prepared = {
        "w1a": w1[:IN1], "w1b": w1[IN1:IN1 + IN2], "w1c": w1[IN1 + IN2:],
        "b1": b1,
        "w2g": pad_to(params["w2g"], HID_P, OUT_P).astype(wdt),
        "b2g": pad_to(params["b2g"], 1, OUT_P).astype(jnp.float32),
        "w2f": pad_to(params["w2f"], HID_P, OUT_P).astype(wdt),
        "b2f": pad_to(params["b2f"], 1, OUT_P).astype(jnp.float32),
    }
    meta = {"hid_p": HID_P, "out": OUT, "out_p": OUT_P,
            "in_splits": (IN1, IN2, IN3)}
    return prepared, meta


def adaptive_feature_concat(x1, x2, x3, prepared, meta, *,
                            tile_b=256, tile_n=1024,
                            out_dtype=None, vmem_limit_bytes=None):
    """Pallas forward of AdaptiveFeatureConcatenationMechanism.

    prepared/meta come from prepare_params().  x1/x2/x3 are fed in their
    native dtype; the in-kernel cast happens after the pipelined DMA.
    """
    B = x1.shape[0]
    IN1, IN2, IN3 = x1.shape[1], x2.shape[1], x3.shape[1]
    assert (IN1, IN2, IN3) == tuple(meta["in_splits"]), "input widths != prepared splits"
    HID_P, OUT, OUT_P = meta["hid_p"], meta["out"], meta["out_p"]
    H2 = 2 * HID_P
    odt = jnp.dtype(out_dtype) if out_dtype is not None else x1.dtype
    if vmem_limit_bytes is None:
        vmem_limit_bytes = _default_vmem_limit_bytes()

    # --- batch tiling -------------------------------------------------------
    # Large B: fixed tile_b.  Mid-size B: force >=2 batch steps so the
    # "parallel" axis shards across both v7x TensorCores.  Tiny B: one step
    # (block second-to-last dim must be a multiple of 8 or the full dim).
    if B > tile_b:
        bb = tile_b
    elif B > 8:
        bb = _round_up(pl.cdiv(B, 2), 8)
    else:
        bb = B
    grid_b = pl.cdiv(B, bb)

    # --- OUT tiling (streams W2 / bounds f32 temporaries; key for v7x VMEM) --
    if OUT_P <= tile_n or OUT_P % tile_n != 0:
        tn = OUT_P                       # single OUT block
    else:
        tn = tile_n
    grid_n = OUT_P // tn

    def xspec(w):
        return pl.BlockSpec((bb, w), lambda i, j: (i, 0))

    # Grid-invariant layer-1 blocks: block index never changes, so
    # double-buffering only wastes VMEM -> single-buffer them.
    def cspec(shape):
        return pl.BlockSpec(shape, lambda i, j: (0, 0), pipeline_mode=pl.Buffered(1))

    # OUT-varying layer-2 blocks: keep default double-buffering so the next
    # OUT tile streams in behind the current tile's matmuls.
    def nspec(shape):
        return pl.BlockSpec(shape, lambda i, j: (0, j))

    kernel = functools.partial(afcm_kernel, hid=HID_P)

    out = pl.pallas_call(
        kernel,
        out_shape=jax.ShapeDtypeStruct((B, OUT_P), odt),
        grid_spec=pltpu.PrefetchScalarGridSpec(
            num_scalar_prefetch=0,
            grid=(grid_b, grid_n),
            in_specs=[
                xspec(IN1), xspec(IN2), xspec(IN3),                     # x1, x2, x3
                cspec((IN1, H2)), cspec((IN2, H2)), cspec((IN3, H2)),   # fused W1 chunks
                cspec((1, H2)),                                          # fused b1
                nspec((HID_P, tn)), nspec((1, tn)),                      # gate layer 2
                nspec((HID_P, tn)), nspec((1, tn)),                      # feature layer 2
            ],
            out_specs=pl.BlockSpec((bb, tn), lambda i, j: (i, j)),
            scratch_shapes=[pltpu.VMEM((bb, H2), jnp.float32)],          # layer-1 hidden
        ),
        compiler_params=pltpu.CompilerParams(
            dimension_semantics=("parallel", "arbitrary"),
            vmem_limit_bytes=vmem_limit_bytes,
        ),
    )(x1, x2, x3,
      prepared["w1a"], prepared["w1b"], prepared["w1c"], prepared["b1"],
      prepared["w2g"], prepared["b2g"], prepared["w2f"], prepared["b2f"])

    # One-time slice only when OUT had to be padded (no-op at 128-aligned OUT).
    return out[:, :OUT] if OUT_P != OUT else out


def reference(x1, x2, x3, params, compute_dtype=None):
    dt = jnp.dtype(compute_dtype) if compute_dtype is not None else jnp.float32
    x = jnp.concatenate([x1, x2, x3], axis=1)

    def lin(h, w, b):
        return jnp.dot(h.astype(dt), w.astype(dt),
                       preferred_element_type=jnp.float32) + b.astype(jnp.float32)

    hg = jnp.maximum(lin(x, params["w1g"], params["b1g"]), 0.0)
    g = jax.nn.sigmoid(lin(hg, params["w2g"], params["b2g"]))
    hf = jnp.maximum(lin(x, params["w1f"], params["b1f"]), 0.0)
    f = lin(hf, params["w2f"], params["b2f"])
    return f * g


if __name__ == "__main__":
    # Small shapes consistent with the module (3000/500/3000 ratio-ish,
    # lane-aligned): each of x1/x2/x3 contributes IN/3 features.
    IN_EACH = 128          # per-input feature width
    IN = 3 * IN_EACH       # 384 (== in_features)
    HID = 128              # hidden_features
    OUT = IN               # out_features

    key = jax.random.PRNGKey(0)
    ks = jax.random.split(key, 17)

    def init_w(k, fan_in, fan_out):
        bound = 1.0 / jnp.sqrt(fan_in)
        return jax.random.uniform(k, (fan_in, fan_out), jnp.float32, -bound, bound)

    def init_b(k, fan_in, fan_out):
        bound = 1.0 / jnp.sqrt(fan_in)
        return jax.random.uniform(k, (1, fan_out), jnp.float32, -bound, bound)

    params = {
        "w1g": init_w(ks[0], IN, HID),  "b1g": init_b(ks[1], IN, HID),
        "w2g": init_w(ks[2], HID, OUT), "b2g": init_b(ks[3], HID, OUT),
        "w1f": init_w(ks[4], IN, HID),  "b1f": init_b(ks[5], IN, HID),
        "w2f": init_w(ks[6], HID, OUT), "b2f": init_b(ks[7], HID, OUT),
    }
    in_splits = (IN_EACH, IN_EACH, IN_EACH)

    # One-time weight prep (fuse / cast / pad / split) -- off the forward path.
    prep_f32, meta_f32 = prepare_params(params, in_splits)
    prep_bf16, meta_bf16 = prepare_params(params, in_splits, compute_dtype=jnp.bfloat16)

    # --- run 1: tiny batch, f32 compute, single batch step, single OUT block ---
    B = 8
    x1 = jax.random.normal(ks[8],  (B, IN_EACH), jnp.float32)
    x2 = jax.random.normal(ks[9],  (B, IN_EACH), jnp.float32)
    x3 = jax.random.normal(ks[10], (B, IN_EACH), jnp.float32)

    out = jax.block_until_ready(adaptive_feature_concat(x1, x2, x3, prep_f32, meta_f32))
    ref = reference(x1, x2, x3, params)
    assert out.shape == (B, OUT)
    assert jnp.allclose(out, ref, atol=1e-4, rtol=1e-4), "f32 mismatch vs reference"

    # --- run 2: bf16 compute path, OUT tiled into 3 blocks (exercises scratch) ---
    out_bf = jax.block_until_ready(
        adaptive_feature_concat(x1, x2, x3, prep_bf16, meta_bf16,
                                tile_n=128, out_dtype=jnp.float32))
    ref_bf = reference(x1, x2, x3, params, compute_dtype=jnp.bfloat16)
    assert jnp.allclose(out_bf, ref_bf, atol=1e-3, rtol=1e-3), "bf16 mismatch vs reference"

    # --- run 3: mid-size batch forced to >=2 batch steps (v7x dual-TC path) ---
    B2 = 48
    y1 = jax.random.normal(ks[11], (B2, IN_EACH), jnp.float32)
    y2 = jax.random.normal(ks[12], (B2, IN_EACH), jnp.float32)
    y3 = jax.random.normal(ks[13], (B2, IN_EACH), jnp.float32)
    out_mid = jax.block_until_ready(
        adaptive_feature_concat(y1, y2, y3, prep_f32, meta_f32))
    ref_mid = reference(y1, y2, y3, params)
    assert out_mid.shape == (B2, OUT)
    assert jnp.allclose(out_mid, ref_mid, atol=1e-4, rtol=1e-4), "mid-batch mismatch"

    # --- run 4: larger batch with both grid axes tiled (2 batch x 3 OUT blocks) ---
    B3 = 512
    z1 = jax.random.normal(ks[14], (B3, IN_EACH), jnp.float32)
    z2 = jax.random.normal(ks[15], (B3, IN_EACH), jnp.float32)
    z3 = jax.random.normal(ks[16], (B3, IN_EACH), jnp.float32)
    out_big = jax.block_until_ready(
        adaptive_feature_concat(z1, z2, z3, prep_f32, meta_f32, tile_b=256, tile_n=128))
    ref_big = reference(z1, z2, z3, params)
    assert out_big.shape == (B3, OUT)
    assert jnp.allclose(out_big, ref_big, atol=1e-4, rtol=1e-4), "tiled mismatch"

    print("KERNEL_OK")
</pallas_src>

<mosaic_0001>
module attributes {stable_mosaic.version = 11 : i64} {
  func.func @afcm_kernel(%arg0: i32, %arg1: i32, %arg2: memref<8x128xf32, #tpu.memory_space<vmem>>, %arg3: memref<8x128xf32, #tpu.memory_space<vmem>>, %arg4: memref<8x128xf32, #tpu.memory_space<vmem>>, %arg5: memref<128x256xf32, #tpu.memory_space<vmem>>, %arg6: memref<128x256xf32, #tpu.memory_space<vmem>>, %arg7: memref<128x256xf32, #tpu.memory_space<vmem>>, %arg8: memref<1x256xf32, #tpu.memory_space<vmem>>, %arg9: memref<128x384xf32, #tpu.memory_space<vmem>>, %arg10: memref<1x384xf32, #tpu.memory_space<vmem>>, %arg11: memref<128x384xf32, #tpu.memory_space<vmem>>, %arg12: memref<1x384xf32, #tpu.memory_space<vmem>>, %arg13: memref<8x384xf32, #tpu.memory_space<vmem>>, %arg14: memref<8x256xf32, #tpu.memory_space<vmem>>) attributes {dimension_semantics = [#tpu.dimension_semantics<parallel>, #tpu.dimension_semantics<arbitrary>], iteration_bounds = array<i64: 1, 1>, scalar_prefetch = 0 : i64, scratch_operands = 1 : i64, tpu.core_type = #tpu.core_type<tc>, window_params = [{transform_indices = @transform_0, window_bounds = array<i64: 8, 128>}, {transform_indices = @transform_1, window_bounds = array<i64: 8, 128>}, {transform_indices = @transform_2, window_bounds = array<i64: 8, 128>}, {pipeline_mode = #tpu.pipeline_mode<synchronous>, transform_indices = @transform_3, window_bounds = array<i64: 128, 256>}, {pipeline_mode = #tpu.pipeline_mode<synchronous>, transform_indices = @transform_4, window_bounds = array<i64: 128, 256>}, {pipeline_mode = #tpu.pipeline_mode<synchronous>, transform_indices = @transform_5, window_bounds = array<i64: 128, 256>}, {pipeline_mode = #tpu.pipeline_mode<synchronous>, transform_indices = @transform_6, window_bounds = array<i64: 1, 256>}, {transform_indices = @transform_7, window_bounds = array<i64: 128, 384>}, {transform_indices = @transform_8, window_bounds = array<i64: 1, 384>}, {transform_indices = @transform_9, window_bounds = array<i64: 128, 384>}, {transform_indices = @transform_10, window_bounds = array<i64: 1, 384>}, {transform_indices = @transform_11, window_bounds = array<i64: 8, 384>}]} {
    %c0_i32 = arith.constant 0 : i32
    %0 = arith.cmpi eq, %arg1, %c0_i32 : i32
    %1 = arith.extui %0 : i1 to i32
    %c0_i32_0 = arith.constant 0 : i32
    %2 = arith.cmpi ne, %1, %c0_i32_0 : i32
    scf.if %2 {
      %c0_15 = arith.constant 0 : index
      %c0_16 = arith.constant 0 : index
      %22 = vector.load %arg2[%c0_15, %c0_16] : memref<8x128xf32, #tpu.memory_space<vmem>>, vector<8x128xf32>
      %c0_17 = arith.constant 0 : index
      %c0_18 = arith.constant 0 : index
      %23 = vector.load %arg5[%c0_17, %c0_18] : memref<128x256xf32, #tpu.memory_space<vmem>>, vector<128x256xf32>
      %cst_19 = arith.constant dense<0.000000e+00> : vector<8x256xf32>
      %24 = tpu.matmul %22, %23, %cst_19 {dimension_numbers = #tpu.dot_dimension_numbers<[1], [0], [0], [1], [0, 0, 1, 1], [], []>} : vector<8x128xf32>, vector<128x256xf32>, vector<8x256xf32> -> vector<8x256xf32>
      %c0_20 = arith.constant 0 : index
      %c0_21 = arith.constant 0 : index
      %25 = vector.load %arg3[%c0_20, %c0_21] : memref<8x128xf32, #tpu.memory_space<vmem>>, vector<8x128xf32>
      %c0_22 = arith.constant 0 : index
      %c0_23 = arith.constant 0 : index
      %26 = vector.load %arg6[%c0_22, %c0_23] : memref<128x256xf32, #tpu.memory_space<vmem>>, vector<128x256xf32>
      %cst_24 = arith.constant dense<0.000000e+00> : vector<8x256xf32>
      %27 = tpu.matmul %25, %26, %cst_24 {dimension_numbers = #tpu.dot_dimension_numbers<[1], [0], [0], [1], [0, 0, 1, 1], [], []>} : vector<8x128xf32>, vector<128x256xf32>, vector<8x256xf32> -> vector<8x256xf32>
      %28 = arith.addf %24, %27 : vector<8x256xf32>
      %c0_25 = arith.constant 0 : index
      %c0_26 = arith.constant 0 : index
      %29 = vector.load %arg4[%c0_25, %c0_26] : memref<8x128xf32, #tpu.memory_space<vmem>>, vector<8x128xf32>
      %c0_27 = arith.constant 0 : index
      %c0_28 = arith.constant 0 : index
      %30 = vector.load %arg7[%c0_27, %c0_28] : memref<128x256xf32, #tpu.memory_space<vmem>>, vector<128x256xf32>
      %cst_29 = arith.constant dense<0.000000e+00> : vector<8x256xf32>
      %31 = tpu.matmul %29, %30, %cst_29 {dimension_numbers = #tpu.dot_dimension_numbers<[1], [0], [0], [1], [0, 0, 1, 1], [], []>} : vector<8x128xf32>, vector<128x256xf32>, vector<8x256xf32> -> vector<8x256xf32>
      %32 = arith.addf %28, %31 : vector<8x256xf32>
      %c0_30 = arith.constant 0 : index
      %c0_31 = arith.constant 0 : index
      %33 = vector.load %arg8[%c0_30, %c0_31] : memref<1x256xf32, #tpu.memory_space<vmem>>, vector<1x256xf32>
      %34 = vector.broadcast %33 : vector<1x256xf32> to vector<8x256xf32>
      %35 = arith.addf %32, %34 : vector<8x256xf32>
      %cst_32 = arith.constant 0.000000e+00 : f32
      %36 = vector.broadcast %cst_32 : f32 to vector<8x256xf32>
      %37 = arith.maximumf %35, %36 : vector<8x256xf32>
      %c0_33 = arith.constant 0 : index
      %c0_34 = arith.constant 0 : index
      %38 = vector.load %arg14[%c0_33, %c0_34] : memref<8x256xf32, #tpu.memory_space<vmem>>, vector<8x256xf32>
      tpu.vector_store %arg14[%c0_33, %c0_34], %37 {strides = array<i32>} : memref<8x256xf32, #tpu.memory_space<vmem>>, vector<8x256xf32>,
    } else {
    }
    %c0 = arith.constant 0 : index
    %c0_1 = arith.constant 0 : index
    %3 = vector.load %arg14[%c0, %c0_1] : memref<8x256xf32, #tpu.memory_space<vmem>>, vector<8x128xf32>
    %c0_2 = arith.constant 0 : index
    %c128 = arith.constant 128 : index
    %4 = vector.load %arg14[%c0_2, %c128] : memref<8x256xf32, #tpu.memory_space<vmem>>, vector<8x128xf32>
    %c0_3 = arith.constant 0 : index
    %c0_4 = arith.constant 0 : index
    %5 = vector.load %arg9[%c0_3, %c0_4] : memref<128x384xf32, #tpu.memory_space<vmem>>, vector<128x384xf32>
    %cst = arith.constant dense<0.000000e+00> : vector<8x384xf32>
    %6 = tpu.matmul %3, %5, %cst {dimension_numbers = #tpu.dot_dimension_numbers<[1], [0], [0], [1], [0, 0, 1, 1], [], []>} : vector<8x128xf32>, vector<128x384xf32>, vector<8x384xf32> -> vector<8x384xf32>
    %c0_5 = arith.constant 0 : index
    %c0_6 = arith.constant 0 : index
    %7 = vector.load %arg10[%c0_5, %c0_6] : memref<1x384xf32, #tpu.memory_space<vmem>>, vector<1x384xf32>
    %8 = vector.broadcast %7 : vector<1x384xf32> to vector<8x384xf32>
    %9 = arith.addf %6, %8 : vector<8x384xf32>
    %10 = arith.negf %9 : vector<8x384xf32>
    %11 = math.exp %10 : vector<8x384xf32>
    %cst_7 = arith.constant 1.000000e+00 : f32
    %12 = vector.broadcast %cst_7 : f32 to vector<8x384xf32>
    %13 = arith.addf %12, %11 : vector<8x384xf32>
    %14 = arith.divf %12, %13 : vector<8x384xf32>
    %c0_8 = arith.constant 0 : index
    %c0_9 = arith.constant 0 : index
    %15 = vector.load %arg11[%c0_8, %c0_9] : memref<128x384xf32, #tpu.memory_space<vmem>>, vector<128x384xf32>
    %cst_10 = arith.constant dense<0.000000e+00> : vector<8x384xf32>
    %16 = tpu.matmul %4, %15, %cst_10 {dimension_numbers = #tpu.dot_dimension_numbers<[1], [0], [0], [1], [0, 0, 1, 1], [], []>} : vector<8x128xf32>, vector<128x384xf32>, vector<8x384xf32> -> vector<8x384xf32>
    %c0_11 = arith.constant 0 : index
    %c0_12 = arith.constant 0 : index
    %17 = vector.load %arg12[%c0_11, %c0_12] : memref<1x384xf32, #tpu.memory_space<vmem>>, vector<1x384xf32>
    %18 = vector.broadcast %17 : vector<1x384xf32> to vector<8x384xf32>
    %19 = arith.addf %16, %18 : vector<8x384xf32>
    %20 = arith.mulf %19, %14 : vector<8x384xf32>
    %c0_13 = arith.constant 0 : index
    %c0_14 = arith.constant 0 : index
    %21 = vector.load %arg13[%c0_13, %c0_14] : memref<8x384xf32, #tpu.memory_space<vmem>>, vector<8x384xf32>
    tpu.vector_store %arg13[%c0_13, %c0_14], %20 {strides = array<i32>} : memref<8x384xf32, #tpu.memory_space<vmem>>, vector<8x384xf32>,
    return
  }
  func.func @transform_0(%arg0: i32, %arg1: i32) -> (i32, i32) {
    %c0_i32 = arith.constant 0 : i32
    %c0_i32_0 = arith.constant 0 : i32
    return %arg0, %c0_i32 : i32, i32
  }
  func.func @transform_1(%arg0: i32, %arg1: i32) -> (i32, i32) {
    %c0_i32 = arith.constant 0 : i32
    %c0_i32_0 = arith.constant 0 : i32
    return %arg0, %c0_i32 : i32, i32
  }
  func.func @transform_2(%arg0: i32, %arg1: i32) -> (i32, i32) {
    %c0_i32 = arith.constant 0 : i32
    %c0_i32_0 = arith.constant 0 : i32
    return %arg0, %c0_i32 : i32, i32
  }
  func.func @transform_3(%arg0: i32, %arg1: i32) -> (i32, i32) {
    %c0_i32 = arith.constant 0 : i32
    %c0_i32_0 = arith.constant 0 : i32
    %c0_i32_1 = arith.constant 0 : i32
    return %c0_i32, %c0_i32_0 : i32, i32
  }
  func.func @transform_4(%arg0: i32, %arg1: i32) -> (i32, i32) {
    %c0_i32 = arith.constant 0 : i32
    %c0_i32_0 = arith.constant 0 : i32
    %c0_i32_1 = arith.constant 0 : i32
    return %c0_i32, %c0_i32_0 : i32, i32
  }
  func.func @transform_5(%arg0: i32, %arg1: i32) -> (i32, i32) {
    %c0_i32 = arith.constant 0 : i32
    %c0_i32_0 = arith.constant 0 : i32
    %c0_i32_1 = arith.constant 0 : i32
    return %c0_i32, %c0_i32_0 : i32, i32
  }
  func.func @transform_6(%arg0: i32, %arg1: i32) -> (i32, i32) {
    %c0_i32 = arith.constant 0 : i32
    %c0_i32_0 = arith.constant 0 : i32
    %c0_i32_1 = arith.constant 0 : i32
    return %c0_i32, %c0_i32_0 : i32, i32
  }
  func.func @transform_7(%arg0: i32, %arg1: i32) -> (i32, i32) {
    %c0_i32 = arith.constant 0 : i32
    %c0_i32_0 = arith.constant 0 : i32
    return %c0_i32, %arg1 : i32, i32
  }
  func.func @transform_8(%arg0: i32, %arg1: i32) -> (i32, i32) {
    %c0_i32 = arith.constant 0 : i32
    %c0_i32_0 = arith.constant 0 : i32
    return %c0_i32, %arg1 : i32, i32
  }
  func.func @transform_9(%arg0: i32, %arg1: i32) -> (i32, i32) {
    %c0_i32 = arith.constant 0 : i32
    %c0_i32_0 = arith.constant 0 : i32
    return %c0_i32, %arg1 : i32, i32
  }
  func.func @transform_10(%arg0: i32, %arg1: i32) -> (i32, i32) {
    %c0_i32 = arith.constant 0 : i32
    %c0_i32_0 = arith.constant 0 : i32
    return %c0_i32, %arg1 : i32, i32
  }
  func.func @transform_11(%arg0: i32, %arg1: i32) -> (i32, i32) {
    %c0_i32 = arith.constant 0 : i32
    return %arg0, %arg1 : i32, i32
  }
}

</mosaic_0001>

<llo_original>
// kernel: tpu_custom_call.1
$region0: #{tpu_custom_call.1}
  #allocation0 [shape = 'u32[]', space=smem, size = 0x4, offset = 0x4, fixed_abs, tag = 'smem constant byte address 0x4 - core index']
  #allocation1 [shape = 'u32[144,128]{1,0:T(1,128)}', space=vmem, size = 0x12000, scoped, tag = 'internal scratch']
  #allocation2 [shape = 'f32[8,256]{1,0:T(8,128)}', space=vmem, size = 0x2000, scoped, tag = 'scratch operand']
  %s0 = inlined_call_operand.hbm [shape: f32[8,128], index: 0, kind: input, shape index: {}]
  %s1 = inlined_call_operand.hbm [shape: f32[8,128], index: 1, kind: input, shape index: {}]
  %s2 = inlined_call_operand.hbm [shape: f32[8,128], index: 2, kind: input, shape index: {}]
  %s3 = inlined_call_operand.hbm [shape: f32[128,256], index: 3, kind: input, shape index: {}]
  %s4 = inlined_call_operand.hbm [shape: f32[128,256], index: 4, kind: input, shape index: {}]
  %s5 = inlined_call_operand.hbm [shape: f32[128,256], index: 5, kind: input, shape index: {}]
  %s6 = inlined_call_operand.vmem [shape: f32[1,256], index: 6, kind: input, shape index: {}]
  %s7 = inlined_call_operand.hbm [shape: f32[128,384], index: 7, kind: input, shape index: {}]
  %s8 = inlined_call_operand.vmem [shape: f32[1,384], index: 8, kind: input, shape index: {}]
  %s9 = inlined_call_operand.hbm [shape: f32[128,384], index: 9, kind: input, shape index: {}]
  %s10 = inlined_call_operand.vmem [shape: f32[1,384], index: 10, kind: input, shape index: {}]
  %s11 = inlined_call_operand.hbm [shape: f32[8,384], index: 11, kind: output, shape index: {}]
  %s12 = sld [smem:[#allocation0]]
  $region90: #{tpu_custom_call.1} parent=0
    _
  %s14 = ssub.s32 1, %s12
  %s15 = scalar_select 0, %s14, %s12
  $region1: #{tpu_custom_call.1} parent=0
    #allocation3 [shape = 'u8[4096]{0}', space=vmem, size = 0x1000, scoped, tag = 'input window, operand 0, single buffered']
    #allocation4 [shape = 's32[1]{0}', space=sflag, size = 0x4, scoped, tag = 'scoped memory for tpu_custom_call.1']
    #allocation5 [shape = 's32[1]{0}', space=sflag, size = 0x4, scoped, tag = 'scoped memory for tpu_custom_call.1']
    #allocation6 [shape = 'u8[4096]{0}', space=vmem, size = 0x1000, scoped, tag = 'input window, operand 1, single buffered']
    #allocation7 [shape = 's32[1]{0}', space=sflag, size = 0x4, scoped, tag = 'scoped memory for tpu_custom_call.1']
    #allocation8 [shape = 'u8[4096]{0}', space=vmem, size = 0x1000, scoped, tag = 'input window, operand 2, single buffered']
    #allocation9 [shape = 'u8[131072]{0}', space=vmem, size = 0x20000, scoped, tag = 'input window, operand 3, single buffered']
    #allocation10 [shape = 's32[1]{0}', space=sflag, size = 0x4, scoped, tag = 'scoped memory for tpu_custom_call.1']
    #allocation11 [shape = 'u8[131072]{0}', space=vmem, size = 0x20000, scoped, tag = 'input window, operand 4, single buffered']
    #allocation12 [shape = 'u8[131072]{0}', space=vmem, size = 0x20000, scoped, tag = 'input window, operand 5, single buffered']
    #allocation13 [shape = 's32[1]{0}', space=sflag, size = 0x4, scoped, tag = 'scoped memory for tpu_custom_call.1']
    #allocation14 [shape = 'u8[196608]{0}', space=vmem, size = 0x30000, scoped, tag = 'input window, operand 7, single buffered']
    #allocation15 [shape = 'u8[196608]{0}', space=vmem, size = 0x30000, scoped, tag = 'input window, operand 9, single buffered']
    #allocation16 [shape = 's32[1]{0}', space=sflag, size = 0x4, scoped, tag = 'scoped memory for tpu_custom_call.1']
    #allocation17 [shape = 'u8[12288]{0}', space=vmem, size = 0x3000, scoped, tag = 'output window, operand 0, single buffered']
    %16 = vsyncpa [#allocation4], 0
    %17 = vsyncpa [#allocation7], 0
    %18 = vsyncpa [#allocation10], 0
    %19 = vsyncpa [#allocation13], 0
    %20 = vsyncpa [#allocation16], 0
    %21 = vsyncpa [#allocation5], 0
    // Predicated region
    $region2: #{tpu_custom_call.1} parent=1 // pred_check
      _
    $region3: #{tpu_custom_call.1} parent=1 // pred_check_branch
      %23 = sbr.rel (0) target = $region5
    $region4: #{tpu_custom_call.1} parent=1 // pred_region
      %s25 = ssub.s32 128, 128
      %26 = vsyncadd [#allocation4], %s25
      %s28 = sshll.u32 [#allocation3], 4
      %s29 = int_to_ptr.vmem [resolvable:$true] %s28
      %31 = dma.hbm_to_vmem [thread:$0]  %s0, 128, %s29, [#allocation4]
    $region5: #{tpu_custom_call.1} parent=1 // pred_fallthru
      _
    // Predicated region
    $region6: #{tpu_custom_call.1} parent=1 // pred_check
      _
    $region7: #{tpu_custom_call.1} parent=1 // pred_check_branch
      %33 = sbr.rel (0) target = $region9
    $region8: #{tpu_custom_call.1} parent=1 // pred_region
      %s35 = ssub.s32 128, 128
      %36 = vsyncadd [#allocation7], %s35
      %s38 = sshll.u32 [#allocation6], 4
      %s39 = int_to_ptr.vmem [resolvable:$true] %s38
      %41 = dma.hbm_to_vmem [thread:$0]  %s1, 128, %s39, [#allocation7]
    $region9: #{tpu_custom_call.1} parent=1 // pred_fallthru
      _
    // Predicated region
    $region10: #{tpu_custom_call.1} parent=1 // pred_check
      _
    $region11: #{tpu_custom_call.1} parent=1 // pred_check_branch
      %43 = sbr.rel (0) target = $region13
    $region12: #{tpu_custom_call.1} parent=1 // pred_region
      %s45 = ssub.s32 128, 128
      %46 = vsyncadd [#allocation7], %s45
      %s48 = sshll.u32 [#allocation8], 4
      %s49 = int_to_ptr.vmem [resolvable:$true] %s48
      %51 = dma.hbm_to_vmem [thread:$0]  %s2, 128, %s49, [#allocation7]
    $region13: #{tpu_custom_call.1} parent=1 // pred_fallthru
      _
    // Predicated region
    $region14: #{tpu_custom_call.1} parent=1 // pred_check
      _
    $region15: #{tpu_custom_call.1} parent=1 // pred_check_branch
      %53 = sbr.rel (0) target = $region17
    $region16: #{tpu_custom_call.1} parent=1 // pred_region
      %s55 = ssub.s32 4096, 4096
      %56 = vsyncadd [#allocation10], %s55
      %s57 = sshll.u32 [#allocation9], 4
      %s58 = int_to_ptr.vmem [resolvable:$true] %s57
      %63 = dma.hbm_to_vmem [thread:$0]  %s3, 4096, %s58, [#allocation10], 256, 256, 16
    $region17: #{tpu_custom_call.1} parent=1 // pred_fallthru
      _
    // Predicated region
    $region18: #{tpu_custom_call.1} parent=1 // pred_check
      _
    $region19: #{tpu_custom_call.1} parent=1 // pred_check_branch
      %65 = sbr.rel (0) target = $region21
    $region20: #{tpu_custom_call.1} parent=1 // pred_region
      %s67 = ssub.s32 4096, 4096
      %68 = vsyncadd [#allocation10], %s67
      %s69 = sshll.u32 [#allocation11], 4
      %s70 = int_to_ptr.vmem [resolvable:$true] %s69
      %75 = dma.hbm_to_vmem [thread:$0]  %s4, 4096, %s70, [#allocation10], 256, 256, 16
    $region21: #{tpu_custom_call.1} parent=1 // pred_fallthru
      _
    // Predicated region
    $region22: #{tpu_custom_call.1} parent=1 // pred_check
      _
    $region23: #{tpu_custom_call.1} parent=1 // pred_check_branch
      %77 = sbr.rel (0) target = $region25
    $region24: #{tpu_custom_call.1} parent=1 // pred_region
      %s79 = ssub.s32 4096, 4096
      %80 = vsyncadd [#allocation13], %s79
      %s81 = sshll.u32 [#allocation12], 4
      %s82 = int_to_ptr.vmem [resolvable:$true] %s81
      %87 = dma.hbm_to_vmem [thread:$0]  %s5, 4096, %s82, [#allocation13], 256, 256, 16
    $region25: #{tpu_custom_call.1} parent=1 // pred_fallthru
      _
    // Predicated region
    $region26: #{tpu_custom_call.1} parent=1 // pred_check
      _
    $region27: #{tpu_custom_call.1} parent=1 // pred_check_branch
      %89 = sbr.rel (0) target = $region29
    $region28: #{tpu_custom_call.1} parent=1 // pred_region
      _
    $region29: #{tpu_custom_call.1} parent=1 // pred_fallthru
      _
    // Predicated region
    $region30: #{tpu_custom_call.1} parent=1 // pred_check
      _
    $region31: #{tpu_custom_call.1} parent=1 // pred_check_branch
      %91 = sbr.rel (0) target = $region33
    $region32: #{tpu_custom_call.1} parent=1 // pred_region
      %s93 = ssub.s32 6144, 6144
      %94 = vsyncadd [#allocation13], %s93
      %s95 = sshll.u32 [#allocation14], 4
      %s96 = int_to_ptr.vmem [resolvable:$true] %s95
      %101 = dma.hbm_to_vmem [thread:$0]  %s7, 6144, %s96, [#allocation13], 384, 384, 24
    $region33: #{tpu_custom_call.1} parent=1 // pred_fallthru
      _
    // Predicated region
    $region34: #{tpu_custom_call.1} parent=1 // pred_check
      _
    $region35: #{tpu_custom_call.1} parent=1 // pred_check_branch
      %103 = sbr.rel (0) target = $region37
    $region36: #{tpu_custom_call.1} parent=1 // pred_region
      _
    $region37: #{tpu_custom_call.1} parent=1 // pred_fallthru
      _
    // Predicated region
    $region38: #{tpu_custom_call.1} parent=1 // pred_check
      _
    $region39: #{tpu_custom_call.1} parent=1 // pred_check_branch
      %105 = sbr.rel (0) target = $region41
    $region40: #{tpu_custom_call.1} parent=1 // pred_region
      %s107 = ssub.s32 6144, 6144
      %108 = vsyncadd [#allocation16], %s107
      %s109 = sshll.u32 [#allocation15], 4
      %s110 = int_to_ptr.vmem [resolvable:$true] %s109
      %115 = dma.hbm_to_vmem [thread:$0]  %s9, 6144, %s110, [#allocation16], 384, 384, 24
    $region41: #{tpu_custom_call.1} parent=1 // pred_fallthru
      _
    // Predicated region
    $region42: #{tpu_custom_call.1} parent=1 // pred_check
      _
    $region43: #{tpu_custom_call.1} parent=1 // pred_check_branch
      %117 = sbr.rel (0) target = $region45
    $region44: #{tpu_custom_call.1} parent=1 // pred_region
      _
    $region45: #{tpu_custom_call.1} parent=1 // pred_fallthru
      _
    // Predicated region
    $region46: #{tpu_custom_call.1} parent=1 // pred_check
      _
    $region47: #{tpu_custom_call.1} parent=1 // pred_check_branch
      %119 = sbr.rel (0) target = $region49
    $region48: #{tpu_custom_call.1} parent=1 // pred_region
      %120 = dma.done [#allocation4], 128
    $region49: #{tpu_custom_call.1} parent=1 // pred_fallthru
      _
    // Predicated region
    $region50: #{tpu_custom_call.1} parent=1 // pred_check
      _
    $region51: #{tpu_custom_call.1} parent=1 // pred_check_branch
      %122 = sbr.rel (0) target = $region53
    $region52: #{tpu_custom_call.1} parent=1 // pred_region
      %123 = dma.done [#allocation7], 128
    $region53: #{tpu_custom_call.1} parent=1 // pred_fallthru
      _
    // Predicated region
    $region54: #{tpu_custom_call.1} parent=1 // pred_check
      _
    $region55: #{tpu_custom_call.1} parent=1 // pred_check_branch
      %125 = sbr.rel (0) target = $region57
    $region56: #{tpu_custom_call.1} parent=1 // pred_region
      %126 = dma.done [#allocation7], 128
    $region57: #{tpu_custom_call.1} parent=1 // pred_fallthru
      _
    // Predicated region
    $region58: #{tpu_custom_call.1} parent=1 // pred_check
      _
    $region59: #{tpu_custom_call.1} parent=1 // pred_check_branch
      %128 = sbr.rel (0) target = $region61
    $region60: #{tpu_custom_call.1} parent=1 // pred_region
      %129 = dma.done [#allocation10], 4096
    $region61: #{tpu_custom_call.1} parent=1 // pred_fallthru
      _
    // Predicated region
    $region62: #{tpu_custom_call.1} parent=1 // pred_check
      _
    $region63: #{tpu_custom_call.1} parent=1 // pred_check_branch
      %131 = sbr.rel (0) target = $region65
    $region64: #{tpu_custom_call.1} parent=1 // pred_region
      %132 = dma.done [#allocation10], 4096
    $region65: #{tpu_custom_call.1} parent=1 // pred_fallthru
      _
    // Predicated region
    $region66: #{tpu_custom_call.1} parent=1 // pred_check
      _
    $region67: #{tpu_custom_call.1} parent=1 // pred_check_branch
      %134 = sbr.rel (0) target = $region69
    $region68: #{tpu_custom_call.1} parent=1 // pred_region
      %135 = dma.done [#allocation13], 4096
    $region69: #{tpu_custom_call.1} parent=1 // pred_fallthru
      _
    // Predicated region
    $region70: #{tpu_custom_call.1} parent=1 // pred_check
      _
    $region71: #{tpu_custom_call.1} parent=1 // pred_check_branch
      %137 = sbr.rel (0) target = $region73
    $region72: #{tpu_custom_call.1} parent=1 // pred_region
      %138 = dma.done [#allocation13], 6144
    $region73: #{tpu_custom_call.1} parent=1 // pred_fallthru
      _
    // Predicated region
    $region74: #{tpu_custom_call.1} parent=1 // pred_check
      _
    $region75: #{tpu_custom_call.1} parent=1 // pred_check_branch
      %140 = sbr.rel (0) target = $region77
    $region76: #{tpu_custom_call.1} parent=1 // pred_region
      %141 = dma.done [#allocation16], 6144
    $region77: #{tpu_custom_call.1} parent=1 // pred_fallthru
      _
    %p142 = scmp.eq.s32.totalorder 0, 0
    // Predicated region
    $region78: #{tpu_custom_call.1} parent=1 // pred_check
      %p143 = pneg %p142
    $region79: #{tpu_custom_call.1} parent=1 // pred_check_branch
      %145 = sbr.rel (%p143) target = $region81
    $region80: #{tpu_custom_call.1} parent=1 // pred_region
      %v146 = vld [vmem:[#allocation3] sm:$0xff]
      %v147 = vld [vmem:[#allocation9] sm:$0xff]
      %v148 = vld [vmem:[#allocation9 + $0x8] sm:$0xff]
      %v149 = vld [vmem:[#allocation9 + $0x10] sm:$0xff]
      %v150 = vld [vmem:[#allocation9 + $0x18] sm:$0xff]
      %v151 = vld [vmem:[#allocation9 + $0x20] sm:$0xff]
      %v152 = vld [vmem:[#allocation9 + $0x28] sm:$0xff]
      %v153 = vld [vmem:[#allocation9 + $0x30] sm:$0xff]
      %v154 = vld [vmem:[#allocation9 + $0x38] sm:$0xff]
      %v155 = vld [vmem:[#allocation9 + $0x40] sm:$0xff]
      %v156 = vld [vmem:[#allocation9 + $0x48] sm:$0xff]
      %v157 = vld [vmem:[#allocation9 + $0x50] sm:$0xff]
      %v158 = vld [vmem:[#allocation9 + $0x58] sm:$0xff]
      %v159 = vld [vmem:[#allocation9 + $0x60] sm:$0xff]
      %v160 = vld [vmem:[#allocation9 + $0x68] sm:$0xff]
      %v161 = vld [vmem:[#allocation9 + $0x70] sm:$0xff]
      %v162 = vld [vmem:[#allocation9 + $0x78] sm:$0xff]
      %v163 = vld [vmem:[#allocation9 + $0x80] sm:$0xff]
      %v164 = vld [vmem:[#allocation9 + $0x88] sm:$0xff]
      %v165 = vld [vmem:[#allocation9 + $0x90] sm:$0xff]
      %v166 = vld [vmem:[#allocation9 + $0x98] sm:$0xff]
      %v167 = vld [vmem:[#allocation9 + $0xa0] sm:$0xff]
      %v168 = vld [vmem:[#allocation9 + $0xa8] sm:$0xff]
      %v169 = vld [vmem:[#allocation9 + $0xb0] sm:$0xff]
      %v170 = vld [vmem:[#allocation9 + $0xb8] sm:$0xff]
      %v171 = vld [vmem:[#allocation9 + $0xc0] sm:$0xff]
      %v172 = vld [vmem:[#allocation9 + $0xc8] sm:$0xff]
      %v173 = vld [vmem:[#allocation9 + $0xd0] sm:$0xff]
      %v174 = vld [vmem:[#allocation9 + $0xd8] sm:$0xff]
      %v175 = vld [vmem:[#allocation9 + $0xe0] sm:$0xff]
      %v176 = vld [vmem:[#allocation9 + $0xe8] sm:$0xff]
      %v177 = vld [vmem:[#allocation9 + $0xf0] sm:$0xff]
      %v178 = vld [vmem:[#allocation9 + $0xf8] sm:$0xff]
      %v179 = vld [vmem:[#allocation6] sm:$0xff]
      %v180 = vld [vmem:[#allocation11] sm:$0xff]
      %v181 = vld [vmem:[#allocation11 + $0x8] sm:$0xff]
      %v182 = vld [vmem:[#allocation11 + $0x10] sm:$0xff]
      %v183 = vld [vmem:[#allocation11 + $0x18] sm:$0xff]
      %v184 = vld [vmem:[#allocation11 + $0x20] sm:$0xff]
      %v185 = vld [vmem:[#allocation11 + $0x28] sm:$0xff]
      %v186 = vld [vmem:[#allocation11 + $0x30] sm:$0xff]
      %v187 = vld [vmem:[#allocation11 + $0x38] sm:$0xff]
      %v188 = vld [vmem:[#allocation11 + $0x40] sm:$0xff]
      %v189 = vld [vmem:[#allocation11 + $0x48] sm:$0xff]
      %v190 = vld [vmem:[#allocation11 + $0x50] sm:$0xff]
      %v191 = vld [vmem:[#allocation11 + $0x58] sm:$0xff]
      %v192 = vld [vmem:[#allocation11 + $0x60] sm:$0xff]
      %v193 = vld [vmem:[#allocation11 + $0x68] sm:$0xff]
      %v194 = vld [vmem:[#allocation11 + $0x70] sm:$0xff]
      %v195 = vld [vmem:[#allocation11 + $0x78] sm:$0xff]
      %v196 = vld [vmem:[#allocation11 + $0x80] sm:$0xff]
      %v197 = vld [vmem:[#allocation11 + $0x88] sm:$0xff]
      %v198 = vld [vmem:[#allocation11 + $0x90] sm:$0xff]
      %v199 = vld [vmem:[#allocation11 + $0x98] sm:$0xff]
      %v200 = vld [vmem:[#allocation11 + $0xa0] sm:$0xff]
      %v201 = vld [vmem:[#allocation11 + $0xa8] sm:$0xff]
      %v202 = vld [vmem:[#allocation11 + $0xb0] sm:$0xff]
      %v203 = vld [vmem:[#allocation11 + $0xb8] sm:$0xff]
      %v204 = vld [vmem:[#allocation11 + $0xc0] sm:$0xff]
      %v205 = vld [vmem:[#allocation11 + $0xc8] sm:$0xff]
      %v206 = vld [vmem:[#allocation11 + $0xd0] sm:$0xff]
      %v207 = vld [vmem:[#allocation11 + $0xd8] sm:$0xff]
      %v208 = vld [vmem:[#allocation11 + $0xe0] sm:$0xff]
      %v209 = vld [vmem:[#allocation11 + $0xe8] sm:$0xff]
      %v210 = vld [vmem:[#allocation11 + $0xf0] sm:$0xff]
      %v211 = vld [vmem:[#allocation11 + $0xf8] sm:$0xff]
      %212 = vmatprep.subr.mxu0 %v211
      %213 = vmatpush1.msra.mxu0 %v210
      %214 = vmatprep.subr.mxu0 %v209
      %215 = vmatpush1.msra.mxu0 %v208
      %216 = vmatprep.subr.mxu0 %v207
      %217 = vmatpush1.msra.mxu0 %v206
      %218 = vmatprep.subr.mxu0 %v205
      %219 = vmatpush1.msra.mxu0 %v204
      %220 = vmatprep.subr.mxu0 %v203
      %221 = vmatpush1.msra.mxu0 %v202
      %222 = vmatprep.subr.mxu0 %v201
      %223 = vmatpush1.msra.mxu0 %v200
      %224 = vmatprep.subr.mxu0 %v199
      %225 = vmatpush1.msra.mxu0 %v198
      %226 = vmatprep.subr.mxu0 %v197
      %227 = vmatpush1.msra.mxu0 %v196
      %228 = vmatprep.subr.mxu0 %v195
      %229 = vmatpush1.msra.mxu0 %v194
      %230 = vmatprep.subr.mxu0 %v193
      %231 = vmatpush1.msra.mxu0 %v192
      %232 = vmatprep.subr.mxu0 %v191
      %233 = vmatpush1.msra.mxu0 %v190
      %234 = vmatprep.subr.mxu0 %v189
      %235 = vmatpush1.msra.mxu0 %v188
      %236 = vmatprep.subr.mxu0 %v187
      %237 = vmatpush1.msra.mxu0 %v186
      %238 = vmatprep.subr.mxu0 %v185
      %239 = vmatpush1.msra.mxu0 %v184
      %240 = vmatprep.subr.mxu0 %v183
      %241 = vmatpush1.msra.mxu0 %v182
      %242 = vmatprep.subr.mxu0 %v181
      %243 = vmatpush1.msra.mxu0 %v180
      %244 = vmatprep.subr.mxu0 0.0
      %245 = vmatpush2.msra.mxu0 0.0
      %246 = vmatprep.subr.mxu0 0.0
      %247 = vmatpush2.msra.mxu0 0.0
      %248 = vmatprep.subr.mxu0 0.0
      %249 = vmatpush2.msra.mxu0 0.0
      %250 = vmatprep.subr.mxu0 0.0
      %251 = vmatpush2.msra.mxu0 0.0
      %252 = vmatprep.subr.mxu0 0.0
      %253 = vmatpush2.msra.mxu0 0.0
      %254 = vmatprep.subr.mxu0 0.0
      %255 = vmatpush2.msra.mxu0 0.0
      %256 = vmatprep.subr.mxu0 0.0
      %257 = vmatpush2.msra.mxu0 0.0
      %258 = vmatprep.subr.mxu0 0.0
      %259 = vmatpush2.msra.mxu0 0.0
      %260 = vmatprep.subr.mxu0 0.0
      %261 = vmatpush2.msra.mxu0 0.0
      %262 = vmatprep.subr.mxu0 0.0
      %263 = vmatpush2.msra.mxu0 0.0
      %264 = vmatprep.subr.mxu0 0.0
      %265 = vmatpush2.msra.mxu0 0.0
      %266 = vmatprep.subr.mxu0 0.0
      %267 = vmatpush2.msra.mxu0 0.0
      %268 = vmatprep.subr.mxu0 0.0
      %269 = vmatpush2.msra.mxu0 0.0
      %270 = vmatprep.subr.mxu0 0.0
      %271 = vmatpush2.msra.mxu0 0.0
      %272 = vmatprep.subr.mxu0 0.0
      %273 = vmatpush2.msra.mxu0 0.0
      %274 = vmatprep.subr.mxu0 0.0
      %275 = vmatpush2.msra.mxu0 0.0
      %276 = vmatprep.mubr.f32.mxu0 0.0
      %277 = vmatmul.mubr.f32.gmra.mxu0 %v179
      %v278 = vpop.f32.mrf.mxu0
      %v279 = vadd.f32 0.0, %v278
      %v280 = vpop.f32.mrf.mxu0
      %v281 = vadd.f32 0.0, %v280
      %282 = vdwg.mxu0
      %283 = vmatprep.subr.mxu0 %v178
      %284 = vmatpush1.msra.mxu0 %v177
      %285 = vmatprep.subr.mxu0 %v176
      %286 = vmatpush1.msra.mxu0 %v175
      %287 = vmatprep.subr.mxu0 %v174
      %288 = vmatpush1.msra.mxu0 %v173
      %289 = vmatprep.subr.mxu0 %v172
      %290 = vmatpush1.msra.mxu0 %v171
      %291 = vmatprep.subr.mxu0 %v170
      %292 = vmatpush1.msra.mxu0 %v169
      %293 = vmatprep.subr.mxu0 %v168
      %294 = vmatpush1.msra.mxu0 %v167
      %295 = vmatprep.subr.mxu0 %v166
      %296 = vmatpush1.msra.mxu0 %v165
      %297 = vmatprep.subr.mxu0 %v164
      %298 = vmatpush1.msra.mxu0 %v163
      %299 = vmatprep.subr.mxu0 %v162
      %300 = vmatpush1.msra.mxu0 %v161
      %301 = vmatprep.subr.mxu0 %v160
      %302 = vmatpush1.msra.mxu0 %v159
      %303 = vmatprep.subr.mxu0 %v158
      %304 = vmatpush1.msra.mxu0 %v157
      %305 = vmatprep.subr.mxu0 %v156
      %306 = vmatpush1.msra.mxu0 %v155
      %307 = vmatprep.subr.mxu0 %v154
      %308 = vmatpush1.msra.mxu0 %v153
      %309 = vmatprep.subr.mxu0 %v152
      %310 = vmatpush1.msra.mxu0 %v151
      %311 = vmatprep.subr.mxu0 %v150
      %312 = vmatpush1.msra.mxu0 %v149
      %313 = vmatprep.subr.mxu0 %v148
      %314 = vmatpush1.msra.mxu0 %v147
      %315 = vmatprep.subr.mxu0 0.0
      %316 = vmatpush2.msra.mxu0 0.0
      %317 = vmatprep.subr.mxu0 0.0
      %318 = vmatpush2.msra.mxu0 0.0
      %319 = vmatprep.subr.mxu0 0.0
      %320 = vmatpush2.msra.mxu0 0.0
      %321 = vmatprep.subr.mxu0 0.0
      %322 = vmatpush2.msra.mxu0 0.0
      %323 = vmatprep.subr.mxu0 0.0
      %324 = vmatpush2.msra.mxu0 0.0
      %325 = vmatprep.subr.mxu0 0.0
      %326 = vmatpush2.msra.mxu0 0.0
      %327 = vmatprep.subr.mxu0 0.0
      %328 = vmatpush2.msra.mxu0 0.0
      %329 = vmatprep.subr.mxu0 0.0
      %330 = vmatpush2.msra.mxu0 0.0
      %331 = vmatprep.subr.mxu0 0.0
      %332 = vmatpush2.msra.mxu0 0.0
      %333 = vmatprep.subr.mxu0 0.0
      %334 = vmatpush2.msra.mxu0 0.0
      %335 = vmatprep.subr.mxu0 0.0
      %336 = vmatpush2.msra.mxu0 0.0
      %337 = vmatprep.subr.mxu0 0.0
      %338 = vmatpush2.msra.mxu0 0.0
      %339 = vmatprep.subr.mxu0 0.0
      %340 = vmatpush2.msra.mxu0 0.0
      %341 = vmatprep.subr.mxu0 0.0
      %342 = vmatpush2.msra.mxu0 0.0
      %343 = vmatprep.subr.mxu0 0.0
      %344 = vmatpush2.msra.mxu0 0.0
      %345 = vmatprep.subr.mxu0 0.0
      %346 = vmatpush2.msra.mxu0 0.0
      %347 = vmatprep.mubr.f32.mxu0 0.0
      %348 = vmatmul.mubr.f32.gmra.mxu0 %v146
      %v349 = vpop.f32.mrf.mxu0
      %v350 = vadd.f32 %v279, %v349
      %v351 = vpop.f32.mrf.mxu0
      %v352 = vadd.f32 %v281, %v351
      %353 = vdwg.mxu0
      %v354 = vld [vmem:[#allocation8] sm:$0xff]
      %v355 = vld [vmem:[#allocation12] sm:$0xff]
      %v356 = vld [vmem:[#allocation12 + $0x8] sm:$0xff]
      %v357 = vld [vmem:[#allocation12 + $0x10] sm:$0xff]
      %v358 = vld [vmem:[#allocation12 + $0x18] sm:$0xff]
      %v359 = vld [vmem:[#allocation12 + $0x20] sm:$0xff]
      %v360 = vld [vmem:[#allocation12 + $0x28] sm:$0xff]
      %v361 = vld [vmem:[#allocation12 + $0x30] sm:$0xff]
      %v362 = vld [vmem:[#allocation12 + $0x38] sm:$0xff]
      %v363 = vld [vmem:[#allocation12 + $0x40] sm:$0xff]
      %v364 = vld [vmem:[#allocation12 + $0x48] sm:$0xff]
      %v365 = vld [vmem:[#allocation12 + $0x50] sm:$0xff]
      %v366 = vld [vmem:[#allocation12 + $0x58] sm:$0xff]
      %v367 = vld [vmem:[#allocation12 + $0x60] sm:$0xff]
      %v368 = vld [vmem:[#allocation12 + $0x68] sm:$0xff]
      %v369 = vld [vmem:[#allocation12 + $0x70] sm:$0xff]
      %v370 = vld [vmem:[#allocation12 + $0x78] sm:$0xff]
      %v371 = vld [vmem:[#allocation12 + $0x80] sm:$0xff]
      %v372 = vld [vmem:[#allocation12 + $0x88] sm:$0xff]
      %v373 = vld [vmem:[#allocation12 + $0x90] sm:$0xff]
      %v374 = vld [vmem:[#allocation12 + $0x98] sm:$0xff]
      %v375 = vld [vmem:[#allocation12 + $0xa0] sm:$0xff]
      %v376 = vld [vmem:[#allocation12 + $0xa8] sm:$0xff]
      %v377 = vld [vmem:[#allocation12 + $0xb0] sm:$0xff]
      %v378 = vld [vmem:[#allocation12 + $0xb8] sm:$0xff]
      %v379 = vld [vmem:[#allocation12 + $0xc0] sm:$0xff]
      %v380 = vld [vmem:[#allocation12 + $0xc8] sm:$0xff]
      %v381 = vld [vmem:[#allocation12 + $0xd0] sm:$0xff]
      %v382 = vld [vmem:[#allocation12 + $0xd8] sm:$0xff]
      %v383 = vld [vmem:[#allocation12 + $0xe0] sm:$0xff]
      %v384 = vld [vmem:[#allocation12 + $0xe8] sm:$0xff]
      %v385 = vld [vmem:[#allocation12 + $0xf0] sm:$0xff]
      %v386 = vld [vmem:[#allocation12 + $0xf8] sm:$0xff]
      %387 = vmatprep.subr.mxu0 %v386
      %388 = vmatpush1.msra.mxu0 %v385
      %389 = vmatprep.subr.mxu0 %v384
      %390 = vmatpush1.msra.mxu0 %v383
      %391 = vmatprep.subr.mxu0 %v382
      %392 = vmatpush1.msra.mxu0 %v381
      %393 = vmatprep.subr.mxu0 %v380
      %394 = vmatpush1.msra.mxu0 %v379
      %395 = vmatprep.subr.mxu0 %v378
      %396 = vmatpush1.msra.mxu0 %v377
      %397 = vmatprep.subr.mxu0 %v376
      %398 = vmatpush1.msra.mxu0 %v375
      %399 = vmatprep.subr.mxu0 %v374
      %400 = vmatpush1.msra.mxu0 %v373
      %401 = vmatprep.subr.mxu0 %v372
      %402 = vmatpush1.msra.mxu0 %v371
      %403 = vmatprep.subr.mxu0 %v370
      %404 = vmatpush1.msra.mxu0 %v369
      %405 = vmatprep.subr.mxu0 %v368
      %406 = vmatpush1.msra.mxu0 %v367
      %407 = vmatprep.subr.mxu0 %v366
      %408 = vmatpush1.msra.mxu0 %v365
      %409 = vmatprep.subr.mxu0 %v364
      %410 = vmatpush1.msra.mxu0 %v363
      %411 = vmatprep.subr.mxu0 %v362
      %412 = vmatpush1.msra.mxu0 %v361
      %413 = vmatprep.subr.mxu0 %v360
      %414 = vmatpush1.msra.mxu0 %v359
      %415 = vmatprep.subr.mxu0 %v358
      %416 = vmatpush1.msra.mxu0 %v357
      %417 = vmatprep.subr.mxu0 %v356
      %418 = vmatpush1.msra.mxu0 %v355
      %419 = vmatprep.subr.mxu0 0.0
      %420 = vmatpush2.msra.mxu0 0.0
      %421 = vmatprep.subr.mxu0 0.0
      %422 = vmatpush2.msra.mxu0 0.0
      %423 = vmatprep.subr.mxu0 0.0
      %424 = vmatpush2.msra.mxu0 0.0
      %425 = vmatprep.subr.mxu0 0.0
      %426 = vmatpush2.msra.mxu0 0.0
      %427 = vmatprep.subr.mxu0 0.0
      %428 = vmatpush2.msra.mxu0 0.0
      %429 = vmatprep.subr.mxu0 0.0
      %430 = vmatpush2.msra.mxu0 0.0
      %431 = vmatprep.subr.mxu0 0.0
      %432 = vmatpush2.msra.mxu0 0.0
      %433 = vmatprep.subr.mxu0 0.0
      %434 = vmatpush2.msra.mxu0 0.0
      %435 = vmatprep.subr.mxu0 0.0
      %436 = vmatpush2.msra.mxu0 0.0
      %437 = vmatprep.subr.mxu0 0.0
      %438 = vmatpush2.msra.mxu0 0.0
      %439 = vmatprep.subr.mxu0 0.0
      %440 = vmatpush2.msra.mxu0 0.0
      %441 = vmatprep.subr.mxu0 0.0
      %442 = vmatpush2.msra.mxu0 0.0
      %443 = vmatprep.subr.mxu0 0.0
      %444 = vmatpush2.msra.mxu0 0.0
      %445 = vmatprep.subr.mxu0 0.0
      %446 = vmatpush2.msra.mxu0 0.0
      %447 = vmatprep.subr.mxu0 0.0
      %448 = vmatpush2.msra.mxu0 0.0
      %449 = vmatprep.subr.mxu0 0.0
      %450 = vmatpush2.msra.mxu0 0.0
      %451 = vmatprep.mubr.f32.mxu0 0.0
      %452 = vmatmul.mubr.f32.gmra.mxu0 %v354
      %v453 = vpop.f32.mrf.mxu0
      %v454 = vadd.f32 0.0, %v453
      %v455 = vpop.f32.mrf.mxu0
      %v456 = vadd.f32 0.0, %v455
      %457 = vdwg.mxu0
      %v458 = vadd.f32 %v350, %v454
      %v459 = vadd.f32 %v352, %v456
      %v460 = vld [vmem:[%s6] sm:$0x3]
      %v462 = vlaneseq
      %v463 = vshrl.u32 %v462, 7
      %v464 = vsub.s32 0, %v463
      %v465 = vrot.slane %v460, %v464
      %v466 = vlaneseq
      %v467 = vshrl.u32 %v466, 7
      %v468 = vsub.s32 1, %v467
      %v469 = vrot.slane %v460, %v468
      %v472 = vadd.f32 %v458, %v465
      %v473 = vadd.f32 %v459, %v469
      %v474 = vmax.f32 %v472, 0.0
      %v475 = vmax.f32 %v473, 0.0
      %476 = vst [vmem:[#allocation2] sm:$0xff] %v474
      %477 = vst [vmem:[#allocation2 + $0x8] sm:$0xff] %v475
    $region81: #{tpu_custom_call.1} parent=1 // pred_fallthru
      _
    %v478 = vld [vmem:[#allocation2] sm:$0xff]
    %v479 = vld [vmem:[#allocation2 + $0x8] sm:$0xff]
    %v480 = vld [vmem:[#allocation14] sm:$0xff]
    %v481 = vld [vmem:[#allocation14 + $0x8] sm:$0xff]
    %v482 = vld [vmem:[#allocation14 + $0x10] sm:$0xff]
    %v483 = vld [vmem:[#allocation14 + $0x18] sm:$0xff]
    %v484 = vld [vmem:[#allocation14 + $0x20] sm:$0xff]
    %v485 = vld [vmem:[#allocation14 + $0x28] sm:$0xff]
    %v486 = vld [vmem:[#allocation14 + $0x30] sm:$0xff]
    %v487 = vld [vmem:[#allocation14 + $0x38] sm:$0xff]
    %v488 = vld [vmem:[#allocation14 + $0x40] sm:$0xff]
    %v489 = vld [vmem:[#allocation14 + $0x48] sm:$0xff]
    %v490 = vld [vmem:[#allocation14 + $0x50] sm:$0xff]
    %v491 = vld [vmem:[#allocation14 + $0x58] sm:$0xff]
    %v492 = vld [vmem:[#allocation14 + $0x60] sm:$0xff]
    %v493 = vld [vmem:[#allocation14 + $0x68] sm:$0xff]
    %v494 = vld [vmem:[#allocation14 + $0x70] sm:$0xff]
    %v495 = vld [vmem:[#allocation14 + $0x78] sm:$0xff]
    %v496 = vld [vmem:[#allocation14 + $0x80] sm:$0xff]
    %v497 = vld [vmem:[#allocation14 + $0x88] sm:$0xff]
    %v498 = vld [vmem:[#allocation14 + $0x90] sm:$0xff]
    %v499 = vld [vmem:[#allocation14 + $0x98] sm:$0xff]
    %v500 = vld [vmem:[#allocation14 + $0xa0] sm:$0xff]
    %v501 = vld [vmem:[#allocation14 + $0xa8] sm:$0xff]
    %v502 = vld [vmem:[#allocation14 + $0xb0] sm:$0xff]
    %v503 = vld [vmem:[#allocation14 + $0xb8] sm:$0xff]
    %v504 = vld [vmem:[#allocation14 + $0xc0] sm:$0xff]
    %v505 = vld [vmem:[#allocation14 + $0xc8] sm:$0xff]
    %v506 = vld [vmem:[#allocation14 + $0xd0] sm:$0xff]
    %v507 = vld [vmem:[#allocation14 + $0xd8] sm:$0xff]
    %v508 = vld [vmem:[#allocation14 + $0xe0] sm:$0xff]
    %v509 = vld [vmem:[#allocation14 + $0xe8] sm:$0xff]
    %v510 = vld [vmem:[#allocation14 + $0xf0] sm:$0xff]
    %v511 = vld [vmem:[#allocation14 + $0xf8] sm:$0xff]
    %v512 = vld [vmem:[#allocation14 + $0x100] sm:$0xff]
    %v513 = vld [vmem:[#allocation14 + $0x108] sm:$0xff]
    %v514 = vld [vmem:[#allocation14 + $0x110] sm:$0xff]
    %v515 = vld [vmem:[#allocation14 + $0x118] sm:$0xff]
    %v516 = vld [vmem:[#allocation14 + $0x120] sm:$0xff]
    %v517 = vld [vmem:[#allocation14 + $0x128] sm:$0xff]
    %v518 = vld [vmem:[#allocation14 + $0x130] sm:$0xff]
    %v519 = vld [vmem:[#allocation14 + $0x138] sm:$0xff]
    %v520 = vld [vmem:[#allocation14 + $0x140] sm:$0xff]
    %v521 = vld [vmem:[#allocation14 + $0x148] sm:$0xff]
    %v522 = vld [vmem:[#allocation14 + $0x150] sm:$0xff]
    %v523 = vld [vmem:[#allocation14 + $0x158] sm:$0xff]
    %v524 = vld [vmem:[#allocation14 + $0x160] sm:$0xff]
    %v525 = vld [vmem:[#allocation14 + $0x168] sm:$0xff]
    %v526 = vld [vmem:[#allocation14 + $0x170] sm:$0xff]
    %v527 = vld [vmem:[#allocation14 + $0x178] sm:$0xff]
    %v528 = vld [vmem:[%s8] sm:$0x7]
    %v530 = vlaneseq
    %v531 = vshrl.u32 %v530, 7
    %v532 = vsub.s32 0, %v531
    %v533 = vrot.slane %v528, %v532
    %v534 = vlaneseq
    %v535 = vshrl.u32 %v534, 7
    %v536 = vsub.s32 1, %v535
    %v537 = vrot.slane %v528, %v536
    %v538 = vlaneseq
    %v539 = vshrl.u32 %v538, 7
    %v540 = vsub.s32 2, %v539
    %v541 = vrot.slane %v528, %v540
    %545 = vmatprep.subr.mxu0 %v526
    %546 = vmatpush1.msra.mxu0 %v525
    %547 = vmatprep.subr.mxu0 %v523
    %548 = vmatpush1.msra.mxu0 %v522
    %549 = vmatprep.subr.mxu0 %v520
    %550 = vmatpush1.msra.mxu0 %v519
    %551 = vmatprep.subr.mxu0 %v517
    %552 = vmatpush1.msra.mxu0 %v516
    %553 = vmatprep.subr.mxu0 %v514
    %554 = vmatpush1.msra.mxu0 %v513
    %555 = vmatprep.subr.mxu0 %v511
    %556 = vmatpush1.msra.mxu0 %v510
    %557 = vmatprep.subr.mxu0 %v508
    %558 = vmatpush1.msra.mxu0 %v507
    %559 = vmatprep.subr.mxu0 %v505
    %560 = vmatpush1.msra.mxu0 %v504
    %561 = vmatprep.subr.mxu0 %v502
    %562 = vmatpush1.msra.mxu0 %v501
    %563 = vmatprep.subr.mxu0 %v499
    %564 = vmatpush1.msra.mxu0 %v498
    %565 = vmatprep.subr.mxu0 %v496
    %566 = vmatpush1.msra.mxu0 %v495
    %567 = vmatprep.subr.mxu0 %v493
    %568 = vmatpush1.msra.mxu0 %v492
    %569 = vmatprep.subr.mxu0 %v490
    %570 = vmatpush1.msra.mxu0 %v489
    %571 = vmatprep.subr.mxu0 %v487
    %572 = vmatpush1.msra.mxu0 %v486
    %573 = vmatprep.subr.mxu0 %v484
    %574 = vmatpush1.msra.mxu0 %v483
    %575 = vmatprep.subr.mxu0 %v481
    %576 = vmatpush1.msra.mxu0 %v480
    %577 = vmatprep.subr.mxu0 0.0
    %578 = vmatpush2.msra.mxu0 0.0
    %579 = vmatprep.subr.mxu0 0.0
    %580 = vmatpush2.msra.mxu0 0.0
    %581 = vmatprep.subr.mxu0 0.0
    %582 = vmatpush2.msra.mxu0 0.0
    %583 = vmatprep.subr.mxu0 0.0
    %584 = vmatpush2.msra.mxu0 0.0
    %585 = vmatprep.subr.mxu0 0.0
    %586 = vmatpush2.msra.mxu0 0.0
    %587 = vmatprep.subr.mxu0 0.0
    %588 = vmatpush2.msra.mxu0 0.0
    %589 = vmatprep.subr.mxu0 0.0
    %590 = vmatpush2.msra.mxu0 0.0
    %591 = vmatprep.subr.mxu0 0.0
    %592 = vmatpush2.msra.mxu0 0.0
    %593 = vmatprep.subr.mxu0 0.0
    %594 = vmatpush2.msra.mxu0 0.0
    %595 = vmatprep.subr.mxu0 0.0
    %596 = vmatpush2.msra.mxu0 0.0
    %597 = vmatprep.subr.mxu0 0.0
    %598 = vmatpush2.msra.mxu0 0.0
    %599 = vmatprep.subr.mxu0 0.0
    %600 = vmatpush2.msra.mxu0 0.0
    %601 = vmatprep.subr.mxu0 0.0
    %602 = vmatpush2.msra.mxu0 0.0
    %603 = vmatprep.subr.mxu0 0.0
    %604 = vmatpush2.msra.mxu0 0.0
    %605 = vmatprep.subr.mxu0 0.0
    %606 = vmatpush2.msra.mxu0 0.0
    %607 = vmatprep.subr.mxu0 0.0
    %608 = vmatpush2.msra.mxu0 0.0
    %609 = vmatprep.mubr.f32.mxu0 0.0
    %610 = vmatmul.mubr.f32.gmra.mxu0 %v478
    %v611 = vpop.f32.mrf.mxu0
    %v612 = vadd.f32 %v533, %v611
    %v613 = vpop.f32.mrf.mxu0
    %v614 = vadd.f32 %v537, %v613
    %615 = vdwg.mxu0
    %616 = vmatprep.subr.mxu0 0.0
    %617 = vmatpush1.msra.mxu0 %v527
    %618 = vmatprep.subr.mxu0 0.0
    %619 = vmatpush1.msra.mxu0 %v524
    %620 = vmatprep.subr.mxu0 0.0
    %621 = vmatpush1.msra.mxu0 %v521
    %622 = vmatprep.subr.mxu0 0.0
    %623 = vmatpush1.msra.mxu0 %v518
    %624 = vmatprep.subr.mxu0 0.0
    %625 = vmatpush1.msra.mxu0 %v515
    %626 = vmatprep.subr.mxu0 0.0
    %627 = vmatpush1.msra.mxu0 %v512
    %628 = vmatprep.subr.mxu0 0.0
    %629 = vmatpush1.msra.mxu0 %v509
    %630 = vmatprep.subr.mxu0 0.0
    %631 = vmatpush1.msra.mxu0 %v506
    %632 = vmatprep.subr.mxu0 0.0
    %633 = vmatpush1.msra.mxu0 %v503
    %634 = vmatprep.subr.mxu0 0.0
    %635 = vmatpush1.msra.mxu0 %v500
    %636 = vmatprep.subr.mxu0 0.0
    %637 = vmatpush1.msra.mxu0 %v497
    %638 = vmatprep.subr.mxu0 0.0
    %639 = vmatpush1.msra.mxu0 %v494
    %640 = vmatprep.subr.mxu0 0.0
    %641 = vmatpush1.msra.mxu0 %v491
    %642 = vmatprep.subr.mxu0 0.0
    %643 = vmatpush1.msra.mxu0 %v488
    %644 = vmatprep.subr.mxu0 0.0
    %645 = vmatpush1.msra.mxu0 %v485
    %646 = vmatprep.subr.mxu0 0.0
    %647 = vmatpush1.msra.mxu0 %v482
    %648 = vmatprep.subr.mxu0 0.0
    %649 = vmatpush2.msra.mxu0 0.0
    %650 = vmatprep.subr.mxu0 0.0
    %651 = vmatpush2.msra.mxu0 0.0
    %652 = vmatprep.subr.mxu0 0.0
    %653 = vmatpush2.msra.mxu0 0.0
    %654 = vmatprep.subr.mxu0 0.0
    %655 = vmatpush2.msra.mxu0 0.0
    %656 = vmatprep.subr.mxu0 0.0
    %657 = vmatpush2.msra.mxu0 0.0
    %658 = vmatprep.subr.mxu0 0.0
    %659 = vmatpush2.msra.mxu0 0.0
    %660 = vmatprep.subr.mxu0 0.0
    %661 = vmatpush2.msra.mxu0 0.0
    %662 = vmatprep.subr.mxu0 0.0
    %663 = vmatpush2.msra.mxu0 0.0
    %664 = vmatprep.subr.mxu0 0.0
    %665 = vmatpush2.msra.mxu0 0.0
    %666 = vmatprep.subr.mxu0 0.0
    %667 = vmatpush2.msra.mxu0 0.0
    %668 = vmatprep.subr.mxu0 0.0
    %669 = vmatpush2.msra.mxu0 0.0
    %670 = vmatprep.subr.mxu0 0.0
    %671 = vmatpush2.msra.mxu0 0.0
    %672 = vmatprep.subr.mxu0 0.0
    %673 = vmatpush2.msra.mxu0 0.0
    %674 = vmatprep.subr.mxu0 0.0
    %675 = vmatpush2.msra.mxu0 0.0
    %676 = vmatprep.subr.mxu0 0.0
    %677 = vmatpush2.msra.mxu0 0.0
    %678 = vmatprep.subr.mxu0 0.0
    %679 = vmatpush2.msra.mxu0 0.0
    %680 = vmatprep.mubr.f32.mxu0 0.0
    %681 = vmatmul.mubr.f32.gmra.mxu0 %v478
    %v682 = vpop.f32.mrf.mxu0
    %v683 = vadd.f32 %v541, %v682
    %v684 = vpop.f32.mrf.mxu0
    %685 = vdwg.mxu0
    %v686 = vxor.u32 %v612, 2147483648
    %v687 = vxor.u32 %v614, 2147483648
    %v688 = vxor.u32 %v683, 2147483648
    %v689 = vmul.f32 %v686, 1.442695
    %v690 = vpow.pop %v689
    %v691 = vmul.f32 %v687, 1.442695
    %v692 = vpow.pop %v691
    %v693 = vmul.f32 %v688, 1.442695
    %v694 = vpow.pop %v693
    %v695 = vadd.f32 %v690, 1.0
    %v696 = vadd.f32 %v692, 1.0
    %v697 = vadd.f32 %v694, 1.0
    %v698 = vrcp.pop %v695
    %v699 = vmul.f32 1.0, %v698
    %v700 = vrcp.pop %v696
    %v701 = vmul.f32 1.0, %v700
    %v702 = vrcp.pop %v697
    %v703 = vmul.f32 1.0, %v702
    %v704 = vld [vmem:[#allocation15] sm:$0xff]
    %v705 = vld [vmem:[#allocation15 + $0x8] sm:$0xff]
    %v706 = vld [vmem:[#allocation15 + $0x10] sm:$0xff]
    %v707 = vld [vmem:[#allocation15 + $0x18] sm:$0xff]
    %v708 = vld [vmem:[#allocation15 + $0x20] sm:$0xff]
    %v709 = vld [vmem:[#allocation15 + $0x28] sm:$0xff]
    %v710 = vld [vmem:[#allocation15 + $0x30] sm:$0xff]
    %v711 = vld [vmem:[#allocation15 + $0x38] sm:$0xff]
    %v712 = vld [vmem:[#allocation15 + $0x40] sm:$0xff]
    %v713 = vld [vmem:[#allocation15 + $0x48] sm:$0xff]
    %v714 = vld [vmem:[#allocation15 + $0x50] sm:$0xff]
    %v715 = vld [vmem:[#allocation15 + $0x58] sm:$0xff]
    %v716 = vld [vmem:[#allocation15 + $0x60] sm:$0xff]
    %v717 = vld [vmem:[#allocation15 + $0x68] sm:$0xff]
    %v718 = vld [vmem:[#allocation15 + $0x70] sm:$0xff]
    %v719 = vld [vmem:[#allocation15 + $0x78] sm:$0xff]
    %v720 = vld [vmem:[#allocation15 + $0x80] sm:$0xff]
    %v721 = vld [vmem:[#allocation15 + $0x88] sm:$0xff]
    %v722 = vld [vmem:[#allocation15 + $0x90] sm:$0xff]
    %v723 = vld [vmem:[#allocation15 + $0x98] sm:$0xff]
    %v724 = vld [vmem:[#allocation15 + $0xa0] sm:$0xff]
    %v725 = vld [vmem:[#allocation15 + $0xa8] sm:$0xff]
    %v726 = vld [vmem:[#allocation15 + $0xb0] sm:$0xff]
    %v727 = vld [vmem:[#allocation15 + $0xb8] sm:$0xff]
    %v728 = vld [vmem:[#allocation15 + $0xc0] sm:$0xff]
    %v729 = vld [vmem:[#allocation15 + $0xc8] sm:$0xff]
    %v730 = vld [vmem:[#allocation15 + $0xd0] sm:$0xff]
    %v731 = vld [vmem:[#allocation15 + $0xd8] sm:$0xff]
    %v732 = vld [vmem:[#allocation15 + $0xe0] sm:$0xff]
    %v733 = vld [vmem:[#allocation15 + $0xe8] sm:$0xff]
    %v734 = vld [vmem:[#allocation15 + $0xf0] sm:$0xff]
    %v735 = vld [vmem:[#allocation15 + $0xf8] sm:$0xff]
    %v736 = vld [vmem:[#allocation15 + $0x100] sm:$0xff]
    %v737 = vld [vmem:[#allocation15 + $0x108] sm:$0xff]
    %v738 = vld [vmem:[#allocation15 + $0x110] sm:$0xff]
    %v739 = vld [vmem:[#allocation15 + $0x118] sm:$0xff]
    %v740 = vld [vmem:[#allocation15 + $0x120] sm:$0xff]
    %v741 = vld [vmem:[#allocation15 + $0x128] sm:$0xff]
    %v742 = vld [vmem:[#allocation15 + $0x130] sm:$0xff]
    %v743 = vld [vmem:[#allocation15 + $0x138] sm:$0xff]
    %v744 = vld [vmem:[#allocation15 + $0x140] sm:$0xff]
    %v745 = vld [vmem:[#allocation15 + $0x148] sm:$0xff]
    %v746 = vld [vmem:[#allocation15 + $0x150] sm:$0xff]
    %v747 = vld [vmem:[#allocation15 + $0x158] sm:$0xff]
    %v748 = vld [vmem:[#allocation15 + $0x160] sm:$0xff]
    %v749 = vld [vmem:[#allocation15 + $0x168] sm:$0xff]
    %v750 = vld [vmem:[#allocation15 + $0x170] sm:$0xff]
    %v751 = vld [vmem:[#allocation15 + $0x178] sm:$0xff]
    %v752 = vld [vmem:[%s10] sm:$0x7]
    %v754 = vlaneseq
    %v755 = vshrl.u32 %v754, 7
    %v756 = vsub.s32 0, %v755
    %v757 = vrot.slane %v752, %v756
    %v758 = vlaneseq
    %v759 = vshrl.u32 %v758, 7
    %v760 = vsub.s32 1, %v759
    %v761 = vrot.slane %v752, %v760
    %v762 = vlaneseq
    %v763 = vshrl.u32 %v762, 7
    %v764 = vsub.s32 2, %v763
    %v765 = vrot.slane %v752, %v764
    %769 = vmatprep.subr.mxu0 %v750
    %770 = vmatpush1.msra.mxu0 %v749
    %771 = vmatprep.subr.mxu0 %v747
    %772 = vmatpush1.msra.mxu0 %v746
    %773 = vmatprep.subr.mxu0 %v744
    %774 = vmatpush1.msra.mxu0 %v743
    %775 = vmatprep.subr.mxu0 %v741
    %776 = vmatpush1.msra.mxu0 %v740
    %777 = vmatprep.subr.mxu0 %v738
    %778 = vmatpush1.msra.mxu0 %v737
    %779 = vmatprep.subr.mxu0 %v735
    %780 = vmatpush1.msra.mxu0 %v734
    %781 = vmatprep.subr.mxu0 %v732
    %782 = vmatpush1.msra.mxu0 %v731
    %783 = vmatprep.subr.mxu0 %v729
    %784 = vmatpush1.msra.mxu0 %v728
    %785 = vmatprep.subr.mxu0 %v726
    %786 = vmatpush1.msra.mxu0 %v725
    %787 = vmatprep.subr.mxu0 %v723
    %788 = vmatpush1.msra.mxu0 %v722
    %789 = vmatprep.subr.mxu0 %v720
    %790 = vmatpush1.msra.mxu0 %v719
    %791 = vmatprep.subr.mxu0 %v717
    %792 = vmatpush1.msra.mxu0 %v716
    %793 = vmatprep.subr.mxu0 %v714
    %794 = vmatpush1.msra.mxu0 %v713
    %795 = vmatprep.subr.mxu0 %v711
    %796 = vmatpush1.msra.mxu0 %v710
    %797 = vmatprep.subr.mxu0 %v708
    %798 = vmatpush1.msra.mxu0 %v707
    %799 = vmatprep.subr.mxu0 %v705
    %800 = vmatpush1.msra.mxu0 %v704
    %801 = vmatprep.subr.mxu0 0.0
    %802 = vmatpush2.msra.mxu0 0.0
    %803 = vmatprep.subr.mxu0 0.0
    %804 = vmatpush2.msra.mxu0 0.0
    %805 = vmatprep.subr.mxu0 0.0
    %806 = vmatpush2.msra.mxu0 0.0
    %807 = vmatprep.subr.mxu0 0.0
    %808 = vmatpush2.msra.mxu0 0.0
    %809 = vmatprep.subr.mxu0 0.0
    %810 = vmatpush2.msra.mxu0 0.0
    %811 = vmatprep.subr.mxu0 0.0
    %812 = vmatpush2.msra.mxu0 0.0
    %813 = vmatprep.subr.mxu0 0.0
    %814 = vmatpush2.msra.mxu0 0.0
    %815 = vmatprep.subr.mxu0 0.0
    %816 = vmatpush2.msra.mxu0 0.0
    %817 = vmatprep.subr.mxu0 0.0
    %818 = vmatpush2.msra.mxu0 0.0
    %819 = vmatprep.subr.mxu0 0.0
    %820 = vmatpush2.msra.mxu0 0.0
    %821 = vmatprep.subr.mxu0 0.0
    %822 = vmatpush2.msra.mxu0 0.0
    %823 = vmatprep.subr.mxu0 0.0
    %824 = vmatpush2.msra.mxu0 0.0
    %825 = vmatprep.subr.mxu0 0.0
    %826 = vmatpush2.msra.mxu0 0.0
    %827 = vmatprep.subr.mxu0 0.0
    %828 = vmatpush2.msra.mxu0 0.0
    %829 = vmatprep.subr.mxu0 0.0
    %830 = vmatpush2.msra.mxu0 0.0
    %831 = vmatprep.subr.mxu0 0.0
    %832 = vmatpush2.msra.mxu0 0.0
    %833 = vmatprep.mubr.f32.mxu0 0.0
    %834 = vmatmul.mubr.f32.gmra.mxu0 %v479
    %v835 = vpop.f32.mrf.mxu0
    %v836 = vadd.f32 %v757, %v835
    %v837 = vpop.f32.mrf.mxu0
    %v838 = vadd.f32 %v761, %v837
    %839 = vdwg.mxu0
    %840 = vmatprep.subr.mxu0 0.0
    %841 = vmatpush1.msra.mxu0 %v751
    %842 = vmatprep.subr.mxu0 0.0
    %843 = vmatpush1.msra.mxu0 %v748
    %844 = vmatprep.subr.mxu0 0.0
    %845 = vmatpush1.msra.mxu0 %v745
    %846 = vmatprep.subr.mxu0 0.0
    %847 = vmatpush1.msra.mxu0 %v742
    %848 = vmatprep.subr.mxu0 0.0
    %849 = vmatpush1.msra.mxu0 %v739
    %850 = vmatprep.subr.mxu0 0.0
    %851 = vmatpush1.msra.mxu0 %v736
    %852 = vmatprep.subr.mxu0 0.0
    %853 = vmatpush1.msra.mxu0 %v733
    %854 = vmatprep.subr.mxu0 0.0
    %855 = vmatpush1.msra.mxu0 %v730
    %856 = vmatprep.subr.mxu0 0.0
    %857 = vmatpush1.msra.mxu0 %v727
    %858 = vmatprep.subr.mxu0 0.0
    %859 = vmatpush1.msra.mxu0 %v724
    %860 = vmatprep.subr.mxu0 0.0
    %861 = vmatpush1.msra.mxu0 %v721
    %862 = vmatprep.subr.mxu0 0.0
    %863 = vmatpush1.msra.mxu0 %v718
    %864 = vmatprep.subr.mxu0 0.0
    %865 = vmatpush1.msra.mxu0 %v715
    %866 = vmatprep.subr.mxu0 0.0
    %867 = vmatpush1.msra.mxu0 %v712
    %868 = vmatprep.subr.mxu0 0.0
    %869 = vmatpush1.msra.mxu0 %v709
    %870 = vmatprep.subr.mxu0 0.0
    %871 = vmatpush1.msra.mxu0 %v706
    %872 = vmatprep.subr.mxu0 0.0
    %873 = vmatpush2.msra.mxu0 0.0
    %874 = vmatprep.subr.mxu0 0.0
    %875 = vmatpush2.msra.mxu0 0.0
    %876 = vmatprep.subr.mxu0 0.0
    %877 = vmatpush2.msra.mxu0 0.0
    %878 = vmatprep.subr.mxu0 0.0
    %879 = vmatpush2.msra.mxu0 0.0
    %880 = vmatprep.subr.mxu0 0.0
    %881 = vmatpush2.msra.mxu0 0.0
    %882 = vmatprep.subr.mxu0 0.0
    %883 = vmatpush2.msra.mxu0 0.0
    %884 = vmatprep.subr.mxu0 0.0
    %885 = vmatpush2.msra.mxu0 0.0
    %886 = vmatprep.subr.mxu0 0.0
    %887 = vmatpush2.msra.mxu0 0.0
    %888 = vmatprep.subr.mxu0 0.0
    %889 = vmatpush2.msra.mxu0 0.0
    %890 = vmatprep.subr.mxu0 0.0
    %891 = vmatpush2.msra.mxu0 0.0
    %892 = vmatprep.subr.mxu0 0.0
    %893 = vmatpush2.msra.mxu0 0.0
    %894 = vmatprep.subr.mxu0 0.0
    %895 = vmatpush2.msra.mxu0 0.0
    %896 = vmatprep.subr.mxu0 0.0
    %897 = vmatpush2.msra.mxu0 0.0
    %898 = vmatprep.subr.mxu0 0.0
    %899 = vmatpush2.msra.mxu0 0.0
    %900 = vmatprep.subr.mxu0 0.0
    %901 = vmatpush2.msra.mxu0 0.0
    %902 = vmatprep.subr.mxu0 0.0
    %903 = vmatpush2.msra.mxu0 0.0
    %904 = vmatprep.mubr.f32.mxu0 0.0
    %905 = vmatmul.mubr.f32.gmra.mxu0 %v479
    %v906 = vpop.f32.mrf.mxu0
    %v907 = vadd.f32 %v765, %v906
    %v908 = vpop.f32.mrf.mxu0
    %909 = vdwg.mxu0
    %v910 = vmul.f32 %v836, %v699
    %v911 = vmul.f32 %v838, %v701
    %v912 = vmul.f32 %v907, %v703
    %913 = vst [vmem:[#allocation17] sm:$0xff] %v910
    %914 = vst [vmem:[#allocation17 + $0x8] sm:$0xff] %v911
    %915 = vst [vmem:[#allocation17 + $0x10] sm:$0xff] %v912
    // Predicated region
    $region82: #{tpu_custom_call.1} parent=1 // pred_check
      _
    $region83: #{tpu_custom_call.1} parent=1 // pred_check_branch
      %917 = sbr.rel (0) target = $region85
    $region84: #{tpu_custom_call.1} parent=1 // pred_region
      %s919 = ssub.s32 384, 384
      %920 = vsyncadd [#allocation5], %s919
      %s922 = sshll.u32 [#allocation17], 4
      %s923 = int_to_ptr.vmem [resolvable:$true] %s922
      %925 = dma.vmem_to_hbm [thread:$0]  %s923, 384, %s11, [#allocation5]
    $region85: #{tpu_custom_call.1} parent=1 // pred_fallthru
      _
    // Predicated region
    $region86: #{tpu_custom_call.1} parent=1 // pred_check
      _
    $region87: #{tpu_custom_call.1} parent=1 // pred_check_branch
      %927 = sbr.rel (0) target = $region89
    $region88: #{tpu_custom_call.1} parent=1 // pred_region
      %928 = dma.done [#allocation5], 384
    $region89: #{tpu_custom_call.1} parent=1 // pred_fallthru
      _
    %929 = vsyncpa [#allocation4], 1
    %930 = vsyncpa [#allocation7], 1
    %931 = vsyncpa [#allocation10], 1
    %932 = vsyncpa [#allocation13], 1
    %933 = vsyncpa [#allocation16], 1
    %934 = vsyncpa [#allocation5], 1

</llo_original>
